<compile_context>
chip_gen: v7x
topology: tpu7x:2x2x1
jax: 0.10.0
libtpu: 0.0.40
codegen_flags: <defaults>
</compile_context>

<pallas_src>
import functools
import math

import jax
import jax.numpy as jnp
from jax.experimental import pallas as pl
from jax.experimental.pallas import tpu as pltpu


def _round_up(x, m):
    return ((x + m - 1) // m) * m


def _vmem_limit_bytes():
    cap = 64 * 1024 * 1024  # conservative fallback (v7x per-TC VMEM)
    try:
        cap = int(pltpu.get_tpu_info().vmem_capacity_bytes)
    except Exception:
        pass
    return max(32 * 1024 * 1024, min(cap - 8 * 1024 * 1024, 100 * 1024 * 1024))


def project_kernel(x_ref, w_ref, support_ref):
    # support tile = x tile @ W   (bf16 inputs, f32 accumulate, store bf16)
    support_ref[...] = jnp.dot(
        x_ref[...], w_ref[...], preferred_element_type=jnp.float32
    ).astype(support_ref.dtype)


def aggregate_kernel(counts_ref, kidx_ref, adj_ref, s_ref, b_ref, out_ref, *,
                     support_resident, tk, max_blocks):
    """out row-tile = sum over nonzero k-blocks of adj[i, k] @ support[k] + bias.

    counts_ref : SMEM int32[nrt]               nonzero k-blocks per row tile
    kidx_ref   : SMEM int32[nrt * max_blocks]  nonzero k-block indices (padded
                                               entries repeat the last valid one)
    """
    i = pl.program_id(0)
    j = pl.program_id(1)

    @pl.when(j == 0)
    def _init():
        # Bias is the additive identity of the reduction -> also correct if a
        # whole adjacency row tile is zero (counts == 0).
        out_ref[...] = jnp.broadcast_to(b_ref[...], out_ref.shape)

    @pl.when(j < counts_ref[i])
    def _accumulate():
        a = adj_ref[...].astype(jnp.bfloat16)          # f32 -> bf16 on the VPU
        if support_resident:
            kblk = kidx_ref[i * max_blocks + j]
            off = pl.multiple_of(kblk * tk, tk)
            s = s_ref[pl.ds(off, tk), :]               # slice resident support
        else:
            s = s_ref[...]                             # streamed support block
        out_ref[...] += jnp.dot(a, s, preferred_element_type=jnp.float32)


def gcn_forward(x, adj, weight, bias, *, tm=1024, tk=1024, support_resident=None):
    """Dense GCN layer:  adj @ (x @ weight) + bias  (bf16 matmuls, f32 acc)."""
    n, f_in = x.shape
    f_out = weight.shape[1]
    assert adj.shape == (n, n)
    out_dtype = x.dtype

    f_out_p = _round_up(f_out, 128)                    # lane-dense output columns

    # ---- tile selection: per-axis clamping, padding <= one tile per axis ----
    tm = _round_up(max(8, min(tm, _round_up(n, 8))), 8)
    if n > 8 and _round_up(n, tm) // tm < 2:
        # keep >= 2 row tiles so the "parallel" axis can shard across cores
        tm = _round_up((n + 1) // 2, 8)
    tk = _round_up(max(128, min(tk, _round_up(n, 128))), 128)

    n_rows_p = _round_up(n, tm)                        # adj rows / output rows
    n_k_p = _round_up(n, tk)                           # adj cols / support rows
    nrt = n_rows_p // tm
    nkt = n_k_p // tk

    # ---- operand preparation (adj stays f32: cast happens in-kernel) --------
    x_bf = x.astype(jnp.bfloat16)
    if n_k_p != n:
        x_bf = jnp.pad(x_bf, ((0, n_k_p - n), (0, 0)))
    adj_f32 = adj.astype(jnp.float32)
    if (n_rows_p, n_k_p) != (n, n):
        adj_f32 = jnp.pad(adj_f32, ((0, n_rows_p - n), (0, n_k_p - n)))
    w_bf = weight.astype(jnp.bfloat16)
    b_f = bias.astype(jnp.float32)
    if f_out_p != f_out:
        w_bf = jnp.pad(w_bf, ((0, 0), (0, f_out_p - f_out)))
        b_f = jnp.pad(b_f, (0, f_out_p - f_out))
    b_f = b_f.reshape(1, f_out_p)

    # ---- block-sparse metadata (one pass; skips DMA+MXU for zero blocks) ----
    adj_blocks = adj_f32.reshape(nrt, tm, nkt, tk)
    nz = jnp.any(adj_blocks != 0.0, axis=(1, 3))                    # (nrt, nkt)
    counts = jnp.sum(nz, axis=1, dtype=jnp.int32)                   # (nrt,)
    blk_ids = jnp.arange(nkt, dtype=jnp.int32)
    sort_key = jnp.where(nz, blk_ids[None, :], nkt + blk_ids[None, :])
    kidx = jnp.argsort(sort_key, axis=1).astype(jnp.int32)          # nz first
    last = jnp.take_along_axis(kidx, jnp.maximum(counts - 1, 0)[:, None], axis=1)
    j_ids = jnp.arange(nkt, dtype=jnp.int32)[None, :]
    kidx = jnp.where(j_ids < counts[:, None], kidx, last)           # repeat last
    try:
        max_blocks = max(int(jnp.max(counts)), 1)                   # concrete
    except Exception:
        max_blocks = nkt                                            # under jit
    kidx_flat = kidx[:, :max_blocks].reshape(-1)                    # 1-D SMEM

    # ---- VMEM budget / resident-support decision -----------------------------
    vmem_limit = _vmem_limit_bytes()
    sup_full_bytes = n_k_p * f_out_p * 2
    tiles_bytes = 2 * tm * tk * 4 + 2 * tm * f_out_p * 4 + 2 * f_out_p * 4
    if support_resident is None:
        support_resident = (tiles_bytes + 2 * sup_full_bytes) <= int(0.75 * vmem_limit)

    # ---- Kernel 1: support = x @ W  (row-tiled, fully parallel) -------------
    support = pl.pallas_call(
        project_kernel,
        out_shape=jax.ShapeDtypeStruct((n_k_p, f_out_p), jnp.bfloat16),
        grid_spec=pltpu.PrefetchScalarGridSpec(
            num_scalar_prefetch=0,
            grid=(n_k_p // tk,),
            in_specs=[
                pl.BlockSpec((tk, f_in), lambda i: (i, 0)),      # x row tile
                pl.BlockSpec((f_in, f_out_p), lambda i: (0, 0)), # weight
            ],
            out_specs=pl.BlockSpec((tk, f_out_p), lambda i: (i, 0)),
        ),
        compiler_params=pltpu.CompilerParams(
            dimension_semantics=("parallel",),
            vmem_limit_bytes=vmem_limit,
        ),
    )(x_bf, w_bf)

    # ---- Kernel 2: out = adj @ support + bias  -------------------------------
    if support_resident:
        s_spec = pl.BlockSpec((n_k_p, f_out_p), lambda i, j, cnt, kid: (0, 0))
    else:
        s_spec = pl.BlockSpec(
            (tk, f_out_p),
            lambda i, j, cnt, kid: (kid[i * max_blocks + j], 0))

    out_p = pl.pallas_call(
        functools.partial(aggregate_kernel,
                          support_resident=support_resident,
                          tk=tk, max_blocks=max_blocks),
        out_shape=jax.ShapeDtypeStruct((n_rows_p, f_out_p), jnp.float32),
        grid_spec=pltpu.PrefetchScalarGridSpec(
            num_scalar_prefetch=2,
            grid=(nrt, max_blocks),
            in_specs=[
                pl.BlockSpec((tm, tk),
                             lambda i, j, cnt, kid: (i, kid[i * max_blocks + j])),
                s_spec,
                pl.BlockSpec((1, f_out_p), lambda i, j, cnt, kid: (0, 0)),
            ],
            out_specs=pl.BlockSpec((tm, f_out_p), lambda i, j, cnt, kid: (i, 0)),
        ),
        compiler_params=pltpu.CompilerParams(
            dimension_semantics=("parallel", "arbitrary"),
            vmem_limit_bytes=vmem_limit,
        ),
    )(counts, kidx_flat, adj_f32, support, b_f)

    return out_p[:n, :f_out].astype(out_dtype)


def glorot_uniform(key, shape, dtype=jnp.float32):
    fan_in, fan_out = shape
    limit = math.sqrt(6.0 / (fan_in + fan_out))
    return jax.random.uniform(key, shape, dtype, minval=-limit, maxval=limit)


if __name__ == "__main__":
    # Small deterministic example: N=512 nodes, 64 -> 32 features.
    N, F_IN, F_OUT = 512, 64, 32

    key = jax.random.PRNGKey(0)
    kx, kadj, kw = jax.random.split(key, 3)

    x = jax.random.normal(kx, (N, F_IN), dtype=jnp.float32)

    # Dense row-normalized adjacency with self loops (torch.spmm path densified).
    a = (jax.random.uniform(kadj, (N, N)) < 0.05).astype(jnp.float32)
    a = a + a.T + jnp.eye(N, dtype=jnp.float32)
    a = jnp.clip(a, 0.0, 1.0)
    deg = jnp.sum(a, axis=1, keepdims=True)
    adj = a / jnp.maximum(deg, 1.0)

    # Parameters (glorot weight, zero bias) — matches reset_parameters().
    weight = glorot_uniform(kw, (F_IN, F_OUT))
    bias = jnp.zeros((F_OUT,), dtype=jnp.float32)

    # Default path: large tiles, VMEM-resident support, block-sparse skipping.
    out = jax.block_until_ready(gcn_forward(x, adj, weight, bias))
    assert out.shape == (N, F_OUT)

    # Also exercise the streamed-support path (data-dependent support index_map,
    # multiple k-blocks) to validate it on hardware.
    out_stream = jax.block_until_ready(
        gcn_forward(x, adj, weight, bias, tm=256, tk=128, support_resident=False))
    assert out_stream.shape == (N, F_OUT)

    # Reference with identical bf16/f32 numerics (tight tolerance).
    ref_support = jnp.dot(
        x.astype(jnp.bfloat16), weight.astype(jnp.bfloat16),
        preferred_element_type=jnp.float32,
    ).astype(jnp.bfloat16)
    ref_bf16 = jnp.dot(
        adj.astype(jnp.bfloat16), ref_support,
        preferred_element_type=jnp.float32,
    ) + bias
    assert jnp.allclose(out, ref_bf16, atol=1e-3, rtol=1e-3)
    assert jnp.allclose(out_stream, ref_bf16, atol=1e-3, rtol=1e-3)

    # Full-precision reference (loose tolerance: bf16 operand rounding).
    ref_f32 = adj @ (x @ weight) + bias
    assert jnp.allclose(out, ref_f32, atol=5e-2, rtol=5e-2)

    print("KERNEL_OK")
</pallas_src>

<mosaic_0001>
module attributes {stable_mosaic.version = 11 : i64} {
  func.func @project_kernel(%arg0: i32, %arg1: memref<512x64xbf16, #tpu.memory_space<vmem>>, %arg2: memref<64x128xbf16, #tpu.memory_space<vmem>>, %arg3: memref<512x128xbf16, #tpu.memory_space<vmem>>) attributes {dimension_semantics = [#tpu.dimension_semantics<parallel>], iteration_bounds = array<i64: 1>, scalar_prefetch = 0 : i64, scratch_operands = 0 : i64, tpu.core_type = #tpu.core_type<tc>, window_params = [{transform_indices = @transform_0, window_bounds = array<i64: 512, 64>}, {pipeline_mode = #tpu.pipeline_mode<synchronous>, transform_indices = @transform_1, window_bounds = array<i64: 64, 128>}, {transform_indices = @transform_2, window_bounds = array<i64: 512, 128>}]} {
    %c0 = arith.constant 0 : index
    %c0_0 = arith.constant 0 : index
    %0 = vector.load %arg1[%c0, %c0_0] : memref<512x64xbf16, #tpu.memory_space<vmem>>, vector<512x64xbf16>
    %c0_1 = arith.constant 0 : index
    %c0_2 = arith.constant 0 : index
    %1 = vector.load %arg2[%c0_1, %c0_2] : memref<64x128xbf16, #tpu.memory_space<vmem>>, vector<64x128xbf16>
    %cst = arith.constant dense<0.000000e+00> : vector<512x128xf32>
    %2 = tpu.matmul %0, %1, %cst {dimension_numbers = #tpu.dot_dimension_numbers<[1], [0], [0], [1], [0, 0, 1, 1], [], []>} : vector<512x64xbf16>, vector<64x128xbf16>, vector<512x128xf32> -> vector<512x128xf32>
    %3 = arith.truncf %2 : vector<512x128xf32> to vector<512x128xbf16>
    %c0_3 = arith.constant 0 : index
    %c0_4 = arith.constant 0 : index
    %4 = vector.load %arg3[%c0_3, %c0_4] : memref<512x128xbf16, #tpu.memory_space<vmem>>, vector<512x128xbf16>
    tpu.vector_store %arg3[%c0_3, %c0_4], %3 {strides = array<i32>} : memref<512x128xbf16, #tpu.memory_space<vmem>>, vector<512x128xbf16>,
    return
  }
  func.func @transform_0(%arg0: i32) -> (i32, i32) {
    %c0_i32 = arith.constant 0 : i32
    %c0_i32_0 = arith.constant 0 : i32
    return %arg0, %c0_i32 : i32, i32
  }
  func.func @transform_1(%arg0: i32) -> (i32, i32) {
    %c0_i32 = arith.constant 0 : i32
    %c0_i32_0 = arith.constant 0 : i32
    %c0_i32_1 = arith.constant 0 : i32
    return %c0_i32, %c0_i32_0 : i32, i32
  }
  func.func @transform_2(%arg0: i32) -> (i32, i32) {
    %c0_i32 = arith.constant 0 : i32
    %c0_i32_0 = arith.constant 0 : i32
    return %arg0, %c0_i32 : i32, i32
  }
}

</mosaic_0001>

<llo_original>
// kernel: tpu_custom_call.1
$region0: #{tpu_custom_call.1}
  #allocation0 [shape = 'u32[]', space=smem, size = 0x4, offset = 0x4, fixed_abs, tag = 'smem constant byte address 0x4 - core index']
  #allocation1 [shape = 'u32[144,128]{1,0:T(1,128)}', space=vmem, size = 0x12000, scoped, tag = 'internal scratch']
  %s0 = inlined_call_operand.vmem [shape: bf16[512,64], index: 0, kind: input, shape index: {}]
  %s1 = inlined_call_operand.vmem [shape: bf16[64,128], index: 1, kind: input, shape index: {}]
  %s2 = inlined_call_operand.hbm [shape: bf16[512,128], index: 2, kind: output, shape index: {}]
  %s3 = sld [smem:[#allocation0]]
  $region18: #{tpu_custom_call.1} parent=0
    _
  %s5 = ssub.s32 1, %s3
  %s6 = scalar_select 0, %s5, %s3
  $region1: #{tpu_custom_call.1} parent=0
    #allocation2 [shape = 'u8[131072]{0}', space=vmem, size = 0x20000, scoped, tag = 'output window, operand 0, single buffered']
    #allocation3 [shape = 's32[1]{0}', space=sflag, size = 0x4, scoped, tag = 'scoped memory for tpu_custom_call.1']
    %7 = vsyncpa [#allocation3], 0
    // Predicated region
    $region2: #{tpu_custom_call.1} parent=1 // pred_check
      _
    $region3: #{tpu_custom_call.1} parent=1 // pred_check_branch
      %9 = sbr.rel (0) target = $region5
    $region4: #{tpu_custom_call.1} parent=1 // pred_region
      _
    $region5: #{tpu_custom_call.1} parent=1 // pred_fallthru
      _
    // Predicated region
    $region6: #{tpu_custom_call.1} parent=1 // pred_check
      _
    $region7: #{tpu_custom_call.1} parent=1 // pred_check_branch
      %11 = sbr.rel (0) target = $region9
    $region8: #{tpu_custom_call.1} parent=1 // pred_region
      _
    $region9: #{tpu_custom_call.1} parent=1 // pred_fallthru
      _
    %v13 = vld [vmem:[%s0] sm:$0xf]
    %v14 = vld [vmem:[%s0 + $0x4] sm:$0xf]
    %v15 = vld [vmem:[%s0 + $0x8] sm:$0xf]
    %v16 = vld [vmem:[%s0 + $0xc] sm:$0xf]
    %v17 = vld [vmem:[%s0 + $0x10] sm:$0xf]
    %v18 = vld [vmem:[%s0 + $0x14] sm:$0xf]
    %v19 = vld [vmem:[%s0 + $0x18] sm:$0xf]
    %v20 = vld [vmem:[%s0 + $0x1c] sm:$0xf]
    %v21 = vld [vmem:[%s0 + $0x20] sm:$0xf]
    %v22 = vld [vmem:[%s0 + $0x24] sm:$0xf]
    %v23 = vld [vmem:[%s0 + $0x28] sm:$0xf]
    %v24 = vld [vmem:[%s0 + $0x2c] sm:$0xf]
    %v25 = vld [vmem:[%s0 + $0x30] sm:$0xf]
    %v26 = vld [vmem:[%s0 + $0x34] sm:$0xf]
    %v27 = vld [vmem:[%s0 + $0x38] sm:$0xf]
    %v28 = vld [vmem:[%s0 + $0x3c] sm:$0xf]
    %v29 = vld [vmem:[%s0 + $0x40] sm:$0xf]
    %v30 = vld [vmem:[%s0 + $0x44] sm:$0xf]
    %v31 = vld [vmem:[%s0 + $0x48] sm:$0xf]
    %v32 = vld [vmem:[%s0 + $0x4c] sm:$0xf]
    %v33 = vld [vmem:[%s0 + $0x50] sm:$0xf]
    %v34 = vld [vmem:[%s0 + $0x54] sm:$0xf]
    %v35 = vld [vmem:[%s0 + $0x58] sm:$0xf]
    %v36 = vld [vmem:[%s0 + $0x5c] sm:$0xf]
    %v37 = vld [vmem:[%s0 + $0x60] sm:$0xf]
    %v38 = vld [vmem:[%s0 + $0x64] sm:$0xf]
    %v39 = vld [vmem:[%s0 + $0x68] sm:$0xf]
    %v40 = vld [vmem:[%s0 + $0x6c] sm:$0xf]
    %v41 = vld [vmem:[%s0 + $0x70] sm:$0xf]
    %v42 = vld [vmem:[%s0 + $0x74] sm:$0xf]
    %v43 = vld [vmem:[%s0 + $0x78] sm:$0xf]
    %v44 = vld [vmem:[%s0 + $0x7c] sm:$0xf]
    %v45 = vld [vmem:[%s0 + $0x80] sm:$0xf]
    %v46 = vld [vmem:[%s0 + $0x84] sm:$0xf]
    %v47 = vld [vmem:[%s0 + $0x88] sm:$0xf]
    %v48 = vld [vmem:[%s0 + $0x8c] sm:$0xf]
    %v49 = vld [vmem:[%s0 + $0x90] sm:$0xf]
    %v50 = vld [vmem:[%s0 + $0x94] sm:$0xf]
    %v51 = vld [vmem:[%s0 + $0x98] sm:$0xf]
    %v52 = vld [vmem:[%s0 + $0x9c] sm:$0xf]
    %v53 = vld [vmem:[%s0 + $0xa0] sm:$0xf]
    %v54 = vld [vmem:[%s0 + $0xa4] sm:$0xf]
    %v55 = vld [vmem:[%s0 + $0xa8] sm:$0xf]
    %v56 = vld [vmem:[%s0 + $0xac] sm:$0xf]
    %v57 = vld [vmem:[%s0 + $0xb0] sm:$0xf]
    %v58 = vld [vmem:[%s0 + $0xb4] sm:$0xf]
    %v59 = vld [vmem:[%s0 + $0xb8] sm:$0xf]
    %v60 = vld [vmem:[%s0 + $0xbc] sm:$0xf]
    %v61 = vld [vmem:[%s0 + $0xc0] sm:$0xf]
    %v62 = vld [vmem:[%s0 + $0xc4] sm:$0xf]
    %v63 = vld [vmem:[%s0 + $0xc8] sm:$0xf]
    %v64 = vld [vmem:[%s0 + $0xcc] sm:$0xf]
    %v65 = vld [vmem:[%s0 + $0xd0] sm:$0xf]
    %v66 = vld [vmem:[%s0 + $0xd4] sm:$0xf]
    %v67 = vld [vmem:[%s0 + $0xd8] sm:$0xf]
    %v68 = vld [vmem:[%s0 + $0xdc] sm:$0xf]
    %v69 = vld [vmem:[%s0 + $0xe0] sm:$0xf]
    %v70 = vld [vmem:[%s0 + $0xe4] sm:$0xf]
    %v71 = vld [vmem:[%s0 + $0xe8] sm:$0xf]
    %v72 = vld [vmem:[%s0 + $0xec] sm:$0xf]
    %v73 = vld [vmem:[%s0 + $0xf0] sm:$0xf]
    %v74 = vld [vmem:[%s0 + $0xf4] sm:$0xf]
    %v75 = vld [vmem:[%s0 + $0xf8] sm:$0xf]
    %v76 = vld [vmem:[%s0 + $0xfc] sm:$0xf]
    %v77 = vld [vmem:[%s1] sm:$0xf]
    %v78 = vld [vmem:[%s1 + $0x4] sm:$0xf]
    %v79 = vld [vmem:[%s1 + $0x8] sm:$0xf]
    %v80 = vld [vmem:[%s1 + $0xc] sm:$0xf]
    %v81 = vld [vmem:[%s1 + $0x10] sm:$0xf]
    %v82 = vld [vmem:[%s1 + $0x14] sm:$0xf]
    %v83 = vld [vmem:[%s1 + $0x18] sm:$0xf]
    %v84 = vld [vmem:[%s1 + $0x1c] sm:$0xf]
    %v149 = vunpack.c.l.b16 %v13
    %v150 = vunpack.c.l.b16 %v14
    %v151 = vunpack.c.l.b16 %v15
    %v152 = vunpack.c.l.b16 %v16
    %v153 = vunpack.c.l.b16 %v17
    %v154 = vunpack.c.l.b16 %v18
    %v155 = vunpack.c.l.b16 %v19
    %v156 = vunpack.c.l.b16 %v20
    %v157 = vunpack.c.l.b16 %v21
    %v158 = vunpack.c.l.b16 %v22
    %v159 = vunpack.c.l.b16 %v23
    %v160 = vunpack.c.l.b16 %v24
    %v161 = vunpack.c.l.b16 %v25
    %v162 = vunpack.c.l.b16 %v26
    %v163 = vunpack.c.l.b16 %v27
    %v164 = vunpack.c.l.b16 %v28
    %v165 = vunpack.c.l.b16 %v29
    %v166 = vunpack.c.l.b16 %v30
    %v167 = vunpack.c.l.b16 %v31
    %v168 = vunpack.c.l.b16 %v32
    %v169 = vunpack.c.l.b16 %v33
    %v170 = vunpack.c.l.b16 %v34
    %v171 = vunpack.c.l.b16 %v35
    %v172 = vunpack.c.l.b16 %v36
    %v173 = vunpack.c.l.b16 %v37
    %v174 = vunpack.c.l.b16 %v38
    %v175 = vunpack.c.l.b16 %v39
    %v176 = vunpack.c.l.b16 %v40
    %v177 = vunpack.c.l.b16 %v41
    %v178 = vunpack.c.l.b16 %v42
    %v179 = vunpack.c.l.b16 %v43
    %v180 = vunpack.c.l.b16 %v44
    %v181 = vunpack.c.l.b16 %v45
    %v182 = vunpack.c.l.b16 %v46
    %v183 = vunpack.c.l.b16 %v47
    %v184 = vunpack.c.l.b16 %v48
    %v185 = vunpack.c.l.b16 %v49
    %v186 = vunpack.c.l.b16 %v50
    %v187 = vunpack.c.l.b16 %v51
    %v188 = vunpack.c.l.b16 %v52
    %v189 = vunpack.c.l.b16 %v53
    %v190 = vunpack.c.l.b16 %v54
    %v191 = vunpack.c.l.b16 %v55
    %v192 = vunpack.c.l.b16 %v56
    %v193 = vunpack.c.l.b16 %v57
    %v194 = vunpack.c.l.b16 %v58
    %v195 = vunpack.c.l.b16 %v59
    %v196 = vunpack.c.l.b16 %v60
    %v197 = vunpack.c.l.b16 %v61
    %v198 = vunpack.c.l.b16 %v62
    %v199 = vunpack.c.l.b16 %v63
    %v200 = vunpack.c.l.b16 %v64
    %v201 = vunpack.c.l.b16 %v65
    %v202 = vunpack.c.l.b16 %v66
    %v203 = vunpack.c.l.b16 %v67
    %v204 = vunpack.c.l.b16 %v68
    %v205 = vunpack.c.l.b16 %v69
    %v206 = vunpack.c.l.b16 %v70
    %v207 = vunpack.c.l.b16 %v71
    %v208 = vunpack.c.l.b16 %v72
    %v209 = vunpack.c.l.b16 %v73
    %v210 = vunpack.c.l.b16 %v74
    %v211 = vunpack.c.l.b16 %v75
    %v212 = vunpack.c.l.b16 %v76
    %v213 = vpack.c.b16 %v150, %v149
    %v214 = vpack.c.b16 %v152, %v151
    %v215 = vpack.c.b16 %v154, %v153
    %v216 = vpack.c.b16 %v156, %v155
    %v217 = vpack.c.b16 %v158, %v157
    %v218 = vpack.c.b16 %v160, %v159
    %v219 = vpack.c.b16 %v162, %v161
    %v220 = vpack.c.b16 %v164, %v163
    %v221 = vpack.c.b16 %v166, %v165
    %v222 = vpack.c.b16 %v168, %v167
    %v223 = vpack.c.b16 %v170, %v169
    %v224 = vpack.c.b16 %v172, %v171
    %v225 = vpack.c.b16 %v174, %v173
    %v226 = vpack.c.b16 %v176, %v175
    %v227 = vpack.c.b16 %v178, %v177
    %v228 = vpack.c.b16 %v180, %v179
    %v229 = vpack.c.b16 %v182, %v181
    %v230 = vpack.c.b16 %v184, %v183
    %v231 = vpack.c.b16 %v186, %v185
    %v232 = vpack.c.b16 %v188, %v187
    %v233 = vpack.c.b16 %v190, %v189
    %v234 = vpack.c.b16 %v192, %v191
    %v235 = vpack.c.b16 %v194, %v193
    %v236 = vpack.c.b16 %v196, %v195
    %v237 = vpack.c.b16 %v198, %v197
    %v238 = vpack.c.b16 %v200, %v199
    %v239 = vpack.c.b16 %v202, %v201
    %v240 = vpack.c.b16 %v204, %v203
    %v241 = vpack.c.b16 %v206, %v205
    %v242 = vpack.c.b16 %v208, %v207
    %v243 = vpack.c.b16 %v210, %v209
    %v244 = vpack.c.b16 %v212, %v211
    %v253 = vunpack.c.l.b16 %v77
    %v254 = vunpack.c.l.b16 %v78
    %v255 = vunpack.c.l.b16 %v79
    %v256 = vunpack.c.l.b16 %v80
    %v257 = vunpack.c.l.b16 %v81
    %v258 = vunpack.c.l.b16 %v82
    %v259 = vunpack.c.l.b16 %v83
    %v260 = vunpack.c.l.b16 %v84
    %v261 = vpack.c.b16 %v254, %v253
    %v262 = vpack.c.b16 %v256, %v255
    %v263 = vpack.c.b16 %v258, %v257
    %v264 = vpack.c.b16 %v260, %v259
    %vm269 = vcmask 523264
    %v271 = vsel %vm269, %v213, 0
    %v274 = vsel %vm269, %v214, 0
    %v277 = vsel %vm269, %v215, 0
    %v280 = vsel %vm269, %v216, 0
    %v283 = vsel %vm269, %v217, 0
    %v286 = vsel %vm269, %v218, 0
    %v289 = vsel %vm269, %v219, 0
    %v292 = vsel %vm269, %v220, 0
    %v295 = vsel %vm269, %v221, 0
    %v298 = vsel %vm269, %v222, 0
    %v301 = vsel %vm269, %v223, 0
    %v304 = vsel %vm269, %v224, 0
    %v307 = vsel %vm269, %v225, 0
    %v310 = vsel %vm269, %v226, 0
    %v313 = vsel %vm269, %v227, 0
    %v316 = vsel %vm269, %v228, 0
    %v319 = vsel %vm269, %v229, 0
    %v322 = vsel %vm269, %v230, 0
    %v325 = vsel %vm269, %v231, 0
    %v328 = vsel %vm269, %v232, 0
    %v331 = vsel %vm269, %v233, 0
    %v334 = vsel %vm269, %v234, 0
    %v337 = vsel %vm269, %v235, 0
    %v340 = vsel %vm269, %v236, 0
    %v343 = vsel %vm269, %v237, 0
    %v346 = vsel %vm269, %v238, 0
    %v349 = vsel %vm269, %v239, 0
    %v352 = vsel %vm269, %v240, 0
    %v355 = vsel %vm269, %v241, 0
    %v358 = vsel %vm269, %v242, 0
    %v361 = vsel %vm269, %v243, 0
    %v364 = vsel %vm269, %v244, 0
    %366 = vmatprep.subr.bf16.mxu0 0
    %367 = vmatpush1.bf16.msra.mxu0 %v261
    %368 = vmatprep.subr.bf16.mxu0 0
    %369 = vmatpush1.bf16.msra.mxu0 %v262
    %370 = vmatprep.subr.bf16.mxu0 0
    %371 = vmatpush1.bf16.msra.mxu0 %v263
    %372 = vmatprep.subr.bf16.mxu0 0
    %373 = vmatpush1.bf16.msra.mxu0 %v264
    %374 = vmatprep.subr.bf16.mxu0 0
    %375 = vmatpush1.bf16.msra.mxu0 0
    %376 = vmatprep.subr.bf16.mxu0 0
    %377 = vmatpush1.bf16.msra.mxu0 0
    %378 = vmatprep.subr.bf16.mxu0 0
    %379 = vmatpush1.bf16.msra.mxu0 0
    %380 = vmatprep.subr.bf16.mxu0 0
    %381 = vmatpush1.bf16.msra.mxu0 0
    %382 = vmatprep.subr.bf16.mxu0 0
    %383 = vmatpush1.bf16.msra.mxu0 0
    %384 = vmatprep.subr.bf16.mxu0 0
    %385 = vmatpush1.bf16.msra.mxu0 0
    %386 = vmatprep.subr.bf16.mxu0 0
    %387 = vmatpush1.bf16.msra.mxu0 0
    %388 = vmatprep.subr.bf16.mxu0 0
    %389 = vmatpush1.bf16.msra.mxu0 0
    %390 = vmatprep.subr.bf16.mxu0 0
    %391 = vmatpush1.bf16.msra.mxu0 0
    %392 = vmatprep.subr.bf16.mxu0 0
    %393 = vmatpush1.bf16.msra.mxu0 0
    %394 = vmatprep.subr.bf16.mxu0 0
    %395 = vmatpush1.bf16.msra.mxu0 0
    %396 = vmatprep.subr.bf16.mxu0 0
    %397 = vmatpush1.bf16.msra.mxu0 0
    %398 = vmatprep.mubr.bf16.mxu0 0
    %399 = vmatmul.mubr.bf16.gmra.mrb[0].mxu0 %v271
    %v400 = vpop.f32.mrb[0].mxu0
    %v401 = vadd.f32 0.0, %v400
    %v402 = vpop.f32.mrb[0].mxu0
    %v403 = vpop.f32.mrb[0].mxu0
    %v404 = vadd.f32 0.0, %v403
    %v405 = vpop.f32.mrb[0].mxu0
    %406 = vmatprep.mubr.bf16.mxu0 0
    %407 = vmatmul.mubr.bf16.gmra.mrb[0].mxu0 %v274
    %v408 = vpop.f32.mrb[0].mxu0
    %v409 = vadd.f32 0.0, %v408
    %v410 = vpop.f32.mrb[0].mxu0
    %v411 = vpop.f32.mrb[0].mxu0
    %v412 = vadd.f32 0.0, %v411
    %v413 = vpop.f32.mrb[0].mxu0
    %414 = vmatprep.mubr.bf16.mxu0 0
    %415 = vmatmul.mubr.bf16.gmra.mrb[0].mxu0 %v277
    %v416 = vpop.f32.mrb[0].mxu0
    %v417 = vadd.f32 0.0, %v416
    %v418 = vpop.f32.mrb[0].mxu0
    %v419 = vpop.f32.mrb[0].mxu0
    %v420 = vadd.f32 0.0, %v419
    %v421 = vpop.f32.mrb[0].mxu0
    %422 = vmatprep.mubr.bf16.mxu0 0
    %423 = vmatmul.mubr.bf16.gmra.mrb[0].mxu0 %v280
    %v424 = vpop.f32.mrb[0].mxu0
    %v425 = vadd.f32 0.0, %v424
    %v426 = vpop.f32.mrb[0].mxu0
    %v427 = vpop.f32.mrb[0].mxu0
    %v428 = vadd.f32 0.0, %v427
    %v429 = vpop.f32.mrb[0].mxu0
    %430 = vmatprep.mubr.bf16.mxu0 0
    %431 = vmatmul.mubr.bf16.gmra.mrb[0].mxu0 %v283
    %v432 = vpop.f32.mrb[0].mxu0
    %v433 = vadd.f32 0.0, %v432
    %v434 = vpop.f32.mrb[0].mxu0
    %v435 = vpop.f32.mrb[0].mxu0
    %v436 = vadd.f32 0.0, %v435
    %v437 = vpop.f32.mrb[0].mxu0
    %438 = vmatprep.mubr.bf16.mxu0 0
    %439 = vmatmul.mubr.bf16.gmra.mrb[0].mxu0 %v286
    %v440 = vpop.f32.mrb[0].mxu0
    %v441 = vadd.f32 0.0, %v440
    %v442 = vpop.f32.mrb[0].mxu0
    %v443 = vpop.f32.mrb[0].mxu0
    %v444 = vadd.f32 0.0, %v443
    %v445 = vpop.f32.mrb[0].mxu0
    %446 = vmatprep.mubr.bf16.mxu0 0
    %447 = vmatmul.mubr.bf16.gmra.mrb[0].mxu0 %v289
    %v448 = vpop.f32.mrb[0].mxu0
    %v449 = vadd.f32 0.0, %v448
    %v450 = vpop.f32.mrb[0].mxu0
    %v451 = vpop.f32.mrb[0].mxu0
    %v452 = vadd.f32 0.0, %v451
    %v453 = vpop.f32.mrb[0].mxu0
    %454 = vmatprep.mubr.bf16.mxu0 0
    %455 = vmatmul.mubr.bf16.gmra.mrb[0].mxu0 %v292
    %v456 = vpop.f32.mrb[0].mxu0
    %v457 = vadd.f32 0.0, %v456
    %v458 = vpop.f32.mrb[0].mxu0
    %v459 = vpop.f32.mrb[0].mxu0
    %v460 = vadd.f32 0.0, %v459
    %v461 = vpop.f32.mrb[0].mxu0
    %462 = vmatprep.mubr.bf16.mxu0 0
    %463 = vmatmul.mubr.bf16.gmra.mrb[0].mxu0 %v295
    %v464 = vpop.f32.mrb[0].mxu0
    %v465 = vadd.f32 0.0, %v464
    %v466 = vpop.f32.mrb[0].mxu0
    %v467 = vpop.f32.mrb[0].mxu0
    %v468 = vadd.f32 0.0, %v467
    %v469 = vpop.f32.mrb[0].mxu0
    %470 = vmatprep.mubr.bf16.mxu0 0
    %471 = vmatmul.mubr.bf16.gmra.mrb[0].mxu0 %v298
    %v472 = vpop.f32.mrb[0].mxu0
    %v473 = vadd.f32 0.0, %v472
    %v474 = vpop.f32.mrb[0].mxu0
    %v475 = vpop.f32.mrb[0].mxu0
    %v476 = vadd.f32 0.0, %v475
    %v477 = vpop.f32.mrb[0].mxu0
    %478 = vmatprep.mubr.bf16.mxu0 0
    %479 = vmatmul.mubr.bf16.gmra.mrb[0].mxu0 %v301
    %v480 = vpop.f32.mrb[0].mxu0
    %v481 = vadd.f32 0.0, %v480
    %v482 = vpop.f32.mrb[0].mxu0
    %v483 = vpop.f32.mrb[0].mxu0
    %v484 = vadd.f32 0.0, %v483
    %v485 = vpop.f32.mrb[0].mxu0
    %486 = vmatprep.mubr.bf16.mxu0 0
    %487 = vmatmul.mubr.bf16.gmra.mrb[0].mxu0 %v304
    %v488 = vpop.f32.mrb[0].mxu0
    %v489 = vadd.f32 0.0, %v488
    %v490 = vpop.f32.mrb[0].mxu0
    %v491 = vpop.f32.mrb[0].mxu0
    %v492 = vadd.f32 0.0, %v491
    %v493 = vpop.f32.mrb[0].mxu0
    %494 = vmatprep.mubr.bf16.mxu0 0
    %495 = vmatmul.mubr.bf16.gmra.mrb[0].mxu0 %v307
    %v496 = vpop.f32.mrb[0].mxu0
    %v497 = vadd.f32 0.0, %v496
    %v498 = vpop.f32.mrb[0].mxu0
    %v499 = vpop.f32.mrb[0].mxu0
    %v500 = vadd.f32 0.0, %v499
    %v501 = vpop.f32.mrb[0].mxu0
    %502 = vmatprep.mubr.bf16.mxu0 0
    %503 = vmatmul.mubr.bf16.gmra.mrb[0].mxu0 %v310
    %v504 = vpop.f32.mrb[0].mxu0
    %v505 = vadd.f32 0.0, %v504
    %v506 = vpop.f32.mrb[0].mxu0
    %v507 = vpop.f32.mrb[0].mxu0
    %v508 = vadd.f32 0.0, %v507
    %v509 = vpop.f32.mrb[0].mxu0
    %510 = vmatprep.mubr.bf16.mxu0 0
    %511 = vmatmul.mubr.bf16.gmra.mrb[0].mxu0 %v313
    %v512 = vpop.f32.mrb[0].mxu0
    %v513 = vadd.f32 0.0, %v512
    %v514 = vpop.f32.mrb[0].mxu0
    %v515 = vpop.f32.mrb[0].mxu0
    %v516 = vadd.f32 0.0, %v515
    %v517 = vpop.f32.mrb[0].mxu0
    %518 = vmatprep.mubr.bf16.mxu0 0
    %519 = vmatmul.mubr.bf16.gmra.mrb[0].mxu0 %v316
    %v520 = vpop.f32.mrb[0].mxu0
    %v521 = vadd.f32 0.0, %v520
    %v522 = vpop.f32.mrb[0].mxu0
    %v523 = vpop.f32.mrb[0].mxu0
    %v524 = vadd.f32 0.0, %v523
    %v525 = vpop.f32.mrb[0].mxu0
    %526 = vmatprep.mubr.bf16.mxu0 0
    %527 = vmatmul.mubr.bf16.gmra.mrb[0].mxu0 %v319
    %v528 = vpop.f32.mrb[0].mxu0
    %v529 = vadd.f32 0.0, %v528
    %v530 = vpop.f32.mrb[0].mxu0
    %v531 = vpop.f32.mrb[0].mxu0
    %v532 = vadd.f32 0.0, %v531
    %v533 = vpop.f32.mrb[0].mxu0
    %534 = vmatprep.mubr.bf16.mxu0 0
    %535 = vmatmul.mubr.bf16.gmra.mrb[0].mxu0 %v322
    %v536 = vpop.f32.mrb[0].mxu0
    %v537 = vadd.f32 0.0, %v536
    %v538 = vpop.f32.mrb[0].mxu0
    %v539 = vpop.f32.mrb[0].mxu0
    %v540 = vadd.f32 0.0, %v539
    %v541 = vpop.f32.mrb[0].mxu0
    %542 = vmatprep.mubr.bf16.mxu0 0
    %543 = vmatmul.mubr.bf16.gmra.mrb[0].mxu0 %v325
    %v544 = vpop.f32.mrb[0].mxu0
    %v545 = vadd.f32 0.0, %v544
    %v546 = vpop.f32.mrb[0].mxu0
    %v547 = vpop.f32.mrb[0].mxu0
    %v548 = vadd.f32 0.0, %v547
    %v549 = vpop.f32.mrb[0].mxu0
    %550 = vmatprep.mubr.bf16.mxu0 0
    %551 = vmatmul.mubr.bf16.gmra.mrb[0].mxu0 %v328
    %v552 = vpop.f32.mrb[0].mxu0
    %v553 = vadd.f32 0.0, %v552
    %v554 = vpop.f32.mrb[0].mxu0
    %v555 = vpop.f32.mrb[0].mxu0
    %v556 = vadd.f32 0.0, %v555
    %v557 = vpop.f32.mrb[0].mxu0
    %558 = vmatprep.mubr.bf16.mxu0 0
    %559 = vmatmul.mubr.bf16.gmra.mrb[0].mxu0 %v331
    %v560 = vpop.f32.mrb[0].mxu0
    %v561 = vadd.f32 0.0, %v560
    %v562 = vpop.f32.mrb[0].mxu0
    %v563 = vpop.f32.mrb[0].mxu0
    %v564 = vadd.f32 0.0, %v563
    %v565 = vpop.f32.mrb[0].mxu0
    %566 = vmatprep.mubr.bf16.mxu0 0
    %567 = vmatmul.mubr.bf16.gmra.mrb[0].mxu0 %v334
    %v568 = vpop.f32.mrb[0].mxu0
    %v569 = vadd.f32 0.0, %v568
    %v570 = vpop.f32.mrb[0].mxu0
    %v571 = vpop.f32.mrb[0].mxu0
    %v572 = vadd.f32 0.0, %v571
    %v573 = vpop.f32.mrb[0].mxu0
    %574 = vmatprep.mubr.bf16.mxu0 0
    %575 = vmatmul.mubr.bf16.gmra.mrb[0].mxu0 %v337
    %v576 = vpop.f32.mrb[0].mxu0
    %v577 = vadd.f32 0.0, %v576
    %v578 = vpop.f32.mrb[0].mxu0
    %v579 = vpop.f32.mrb[0].mxu0
    %v580 = vadd.f32 0.0, %v579
    %v581 = vpop.f32.mrb[0].mxu0
    %582 = vmatprep.mubr.bf16.mxu0 0
    %583 = vmatmul.mubr.bf16.gmra.mrb[0].mxu0 %v340
    %v584 = vpop.f32.mrb[0].mxu0
    %v585 = vadd.f32 0.0, %v584
    %v586 = vpop.f32.mrb[0].mxu0
    %v587 = vpop.f32.mrb[0].mxu0
    %v588 = vadd.f32 0.0, %v587
    %v589 = vpop.f32.mrb[0].mxu0
    %590 = vmatprep.mubr.bf16.mxu0 0
    %591 = vmatmul.mubr.bf16.gmra.mrb[0].mxu0 %v343
    %v592 = vpop.f32.mrb[0].mxu0
    %v593 = vadd.f32 0.0, %v592
    %v594 = vpop.f32.mrb[0].mxu0
    %v595 = vpop.f32.mrb[0].mxu0
    %v596 = vadd.f32 0.0, %v595
    %v597 = vpop.f32.mrb[0].mxu0
    %598 = vmatprep.mubr.bf16.mxu0 0
    %599 = vmatmul.mubr.bf16.gmra.mrb[0].mxu0 %v346
    %v600 = vpop.f32.mrb[0].mxu0
    %v601 = vadd.f32 0.0, %v600
    %v602 = vpop.f32.mrb[0].mxu0
    %v603 = vpop.f32.mrb[0].mxu0
    %v604 = vadd.f32 0.0, %v603
    %v605 = vpop.f32.mrb[0].mxu0
    %606 = vmatprep.mubr.bf16.mxu0 0
    %607 = vmatmul.mubr.bf16.gmra.mrb[0].mxu0 %v349
    %v608 = vpop.f32.mrb[0].mxu0
    %v609 = vadd.f32 0.0, %v608
    %v610 = vpop.f32.mrb[0].mxu0
    %v611 = vpop.f32.mrb[0].mxu0
    %v612 = vadd.f32 0.0, %v611
    %v613 = vpop.f32.mrb[0].mxu0
    %614 = vmatprep.mubr.bf16.mxu0 0
    %615 = vmatmul.mubr.bf16.gmra.mrb[0].mxu0 %v352
    %v616 = vpop.f32.mrb[0].mxu0
    %v617 = vadd.f32 0.0, %v616
    %v618 = vpop.f32.mrb[0].mxu0
    %v619 = vpop.f32.mrb[0].mxu0
    %v620 = vadd.f32 0.0, %v619
    %v621 = vpop.f32.mrb[0].mxu0
    %622 = vmatprep.mubr.bf16.mxu0 0
    %623 = vmatmul.mubr.bf16.gmra.mrb[0].mxu0 %v355
    %v624 = vpop.f32.mrb[0].mxu0
    %v625 = vadd.f32 0.0, %v624
    %v626 = vpop.f32.mrb[0].mxu0
    %v627 = vpop.f32.mrb[0].mxu0
    %v628 = vadd.f32 0.0, %v627
    %v629 = vpop.f32.mrb[0].mxu0
    %630 = vmatprep.mubr.bf16.mxu0 0
    %631 = vmatmul.mubr.bf16.gmra.mrb[0].mxu0 %v358
    %v632 = vpop.f32.mrb[0].mxu0
    %v633 = vadd.f32 0.0, %v632
    %v634 = vpop.f32.mrb[0].mxu0
    %v635 = vpop.f32.mrb[0].mxu0
    %v636 = vadd.f32 0.0, %v635
    %v637 = vpop.f32.mrb[0].mxu0
    %638 = vmatprep.mubr.bf16.mxu0 0
    %639 = vmatmul.mubr.bf16.gmra.mrb[0].mxu0 %v361
    %v640 = vpop.f32.mrb[0].mxu0
    %v641 = vadd.f32 0.0, %v640
    %v642 = vpop.f32.mrb[0].mxu0
    %v643 = vpop.f32.mrb[0].mxu0
    %v644 = vadd.f32 0.0, %v643
    %v645 = vpop.f32.mrb[0].mxu0
    %646 = vmatprep.mubr.bf16.mxu0 0
    %647 = vmatmul.mubr.bf16.gmra.mrb[0].mxu0 %v364
    %v648 = vpop.f32.mrb[0].mxu0
    %v649 = vadd.f32 0.0, %v648
    %v650 = vpop.f32.mrb[0].mxu0
    %v651 = vpop.f32.mrb[0].mxu0
    %v652 = vadd.f32 0.0, %v651
    %v653 = vpop.f32.mrb[0].mxu0
    %654 = vdwg.mxu0
    %v655 = vpack.c.bf16 %v404, %v401
    %v656 = vpack.c.bf16 %v412, %v409
    %v657 = vpack.c.bf16 %v420, %v417
    %v658 = vpack.c.bf16 %v428, %v425
    %v659 = vpack.c.bf16 %v436, %v433
    %v660 = vpack.c.bf16 %v444, %v441
    %v661 = vpack.c.bf16 %v452, %v449
    %v662 = vpack.c.bf16 %v460, %v457
    %v663 = vpack.c.bf16 %v468, %v465
    %v664 = vpack.c.bf16 %v476, %v473
    %v665 = vpack.c.bf16 %v484, %v481
    %v666 = vpack.c.bf16 %v492, %v489
    %v667 = vpack.c.bf16 %v500, %v497
    %v668 = vpack.c.bf16 %v508, %v505
    %v669 = vpack.c.bf16 %v516, %v513
    %v670 = vpack.c.bf16 %v524, %v521
    %v671 = vpack.c.bf16 %v532, %v529
    %v672 = vpack.c.bf16 %v540, %v537
    %v673 = vpack.c.bf16 %v548, %v545
    %v674 = vpack.c.bf16 %v556, %v553
    %v675 = vpack.c.bf16 %v564, %v561
    %v676 = vpack.c.bf16 %v572, %v569
    %v677 = vpack.c.bf16 %v580, %v577
    %v678 = vpack.c.bf16 %v588, %v585
    %v679 = vpack.c.bf16 %v596, %v593
    %v680 = vpack.c.bf16 %v604, %v601
    %v681 = vpack.c.bf16 %v612, %v609
    %v682 = vpack.c.bf16 %v620, %v617
    %v683 = vpack.c.bf16 %v628, %v625
    %v684 = vpack.c.bf16 %v636, %v633
    %v685 = vpack.c.bf16 %v644, %v641
    %v686 = vpack.c.bf16 %v652, %v649
    %v719 = vunpack.c.l.b16 %v655
    %v720 = vunpack.c.h.b16 %v655
    %v721 = vunpack.c.l.b16 %v656
    %v722 = vunpack.c.h.b16 %v656
    %v723 = vunpack.c.l.b16 %v657
    %v724 = vunpack.c.h.b16 %v657
    %v725 = vunpack.c.l.b16 %v658
    %v726 = vunpack.c.h.b16 %v658
    %v727 = vunpack.c.l.b16 %v659
    %v728 = vunpack.c.h.b16 %v659
    %v729 = vunpack.c.l.b16 %v660
    %v730 = vunpack.c.h.b16 %v660
    %v731 = vunpack.c.l.b16 %v661
    %v732 = vunpack.c.h.b16 %v661
    %v733 = vunpack.c.l.b16 %v662
    %v734 = vunpack.c.h.b16 %v662
    %v735 = vunpack.c.l.b16 %v663
    %v736 = vunpack.c.h.b16 %v663
    %v737 = vunpack.c.l.b16 %v664
    %v738 = vunpack.c.h.b16 %v664
    %v739 = vunpack.c.l.b16 %v665
    %v740 = vunpack.c.h.b16 %v665
    %v741 = vunpack.c.l.b16 %v666
    %v742 = vunpack.c.h.b16 %v666
    %v743 = vunpack.c.l.b16 %v667
    %v744 = vunpack.c.h.b16 %v667
    %v745 = vunpack.c.l.b16 %v668
    %v746 = vunpack.c.h.b16 %v668
    %v747 = vunpack.c.l.b16 %v669
    %v748 = vunpack.c.h.b16 %v669
    %v749 = vunpack.c.l.b16 %v670
    %v750 = vunpack.c.h.b16 %v670
    %v751 = vunpack.c.l.b16 %v671
    %v752 = vunpack.c.h.b16 %v671
    %v753 = vunpack.c.l.b16 %v672
    %v754 = vunpack.c.h.b16 %v672
    %v755 = vunpack.c.l.b16 %v673
    %v756 = vunpack.c.h.b16 %v673
    %v757 = vunpack.c.l.b16 %v674
    %v758 = vunpack.c.h.b16 %v674
    %v759 = vunpack.c.l.b16 %v675
    %v760 = vunpack.c.h.b16 %v675
    %v761 = vunpack.c.l.b16 %v676
    %v762 = vunpack.c.h.b16 %v676
    %v763 = vunpack.c.l.b16 %v677
    %v764 = vunpack.c.h.b16 %v677
    %v765 = vunpack.c.l.b16 %v678
    %v766 = vunpack.c.h.b16 %v678
    %v767 = vunpack.c.l.b16 %v679
    %v768 = vunpack.c.h.b16 %v679
    %v769 = vunpack.c.l.b16 %v680
    %v770 = vunpack.c.h.b16 %v680
    %v771 = vunpack.c.l.b16 %v681
    %v772 = vunpack.c.h.b16 %v681
    %v773 = vunpack.c.l.b16 %v682
    %v774 = vunpack.c.h.b16 %v682
    %v775 = vunpack.c.l.b16 %v683
    %v776 = vunpack.c.h.b16 %v683
    %v777 = vunpack.c.l.b16 %v684
    %v778 = vunpack.c.h.b16 %v684
    %v779 = vunpack.c.l.b16 %v685
    %v780 = vunpack.c.h.b16 %v685
    %v781 = vunpack.c.l.b16 %v686
    %v782 = vunpack.c.h.b16 %v686
    %v783 = vpack.c.b16 %v719, %v719
    %v784 = vpack.c.b16 %v720, %v720
    %v785 = vpack.c.b16 %v721, %v721
    %v786 = vpack.c.b16 %v722, %v722
    %v787 = vpack.c.b16 %v723, %v723
    %v788 = vpack.c.b16 %v724, %v724
    %v789 = vpack.c.b16 %v725, %v725
    %v790 = vpack.c.b16 %v726, %v726
    %v791 = vpack.c.b16 %v727, %v727
    %v792 = vpack.c.b16 %v728, %v728
    %v793 = vpack.c.b16 %v729, %v729
    %v794 = vpack.c.b16 %v730, %v730
    %v795 = vpack.c.b16 %v731, %v731
    %v796 = vpack.c.b16 %v732, %v732
    %v797 = vpack.c.b16 %v733, %v733
    %v798 = vpack.c.b16 %v734, %v734
    %v799 = vpack.c.b16 %v735, %v735
    %v800 = vpack.c.b16 %v736, %v736
    %v801 = vpack.c.b16 %v737, %v737
    %v802 = vpack.c.b16 %v738, %v738
    %v803 = vpack.c.b16 %v739, %v739
    %v804 = vpack.c.b16 %v740, %v740
    %v805 = vpack.c.b16 %v741, %v741
    %v806 = vpack.c.b16 %v742, %v742
    %v807 = vpack.c.b16 %v743, %v743
    %v808 = vpack.c.b16 %v744, %v744
    %v809 = vpack.c.b16 %v745, %v745
    %v810 = vpack.c.b16 %v746, %v746
    %v811 = vpack.c.b16 %v747, %v747
    %v812 = vpack.c.b16 %v748, %v748
    %v813 = vpack.c.b16 %v749, %v749
    %v814 = vpack.c.b16 %v750, %v750
    %v815 = vpack.c.b16 %v751, %v751
    %v816 = vpack.c.b16 %v752, %v752
    %v817 = vpack.c.b16 %v753, %v753
    %v818 = vpack.c.b16 %v754, %v754
    %v819 = vpack.c.b16 %v755, %v755
    %v820 = vpack.c.b16 %v756, %v756
    %v821 = vpack.c.b16 %v757, %v757
    %v822 = vpack.c.b16 %v758, %v758
    %v823 = vpack.c.b16 %v759, %v759
    %v824 = vpack.c.b16 %v760, %v760
    %v825 = vpack.c.b16 %v761, %v761
    %v826 = vpack.c.b16 %v762, %v762
    %v827 = vpack.c.b16 %v763, %v763
    %v828 = vpack.c.b16 %v764, %v764
    %v829 = vpack.c.b16 %v765, %v765
    %v830 = vpack.c.b16 %v766, %v766
    %v831 = vpack.c.b16 %v767, %v767
    %v832 = vpack.c.b16 %v768, %v768
    %v833 = vpack.c.b16 %v769, %v769
    %v834 = vpack.c.b16 %v770, %v770
    %v835 = vpack.c.b16 %v771, %v771
    %v836 = vpack.c.b16 %v772, %v772
    %v837 = vpack.c.b16 %v773, %v773
    %v838 = vpack.c.b16 %v774, %v774
    %v839 = vpack.c.b16 %v775, %v775
    %v840 = vpack.c.b16 %v776, %v776
    %v841 = vpack.c.b16 %v777, %v777
    %v842 = vpack.c.b16 %v778, %v778
    %v843 = vpack.c.b16 %v779, %v779
    %v844 = vpack.c.b16 %v780, %v780
    %v845 = vpack.c.b16 %v781, %v781
    %v846 = vpack.c.b16 %v782, %v782
    %911 = vst [vmem:[#allocation2] sm:$0xf] %v783
    %912 = vst [vmem:[#allocation2 + $0x4] sm:$0xf] %v784
    %913 = vst [vmem:[#allocation2 + $0x8] sm:$0xf] %v785
    %914 = vst [vmem:[#allocation2 + $0xc] sm:$0xf] %v786
    %915 = vst [vmem:[#allocation2 + $0x10] sm:$0xf] %v787
    %916 = vst [vmem:[#allocation2 + $0x14] sm:$0xf] %v788
    %917 = vst [vmem:[#allocation2 + $0x18] sm:$0xf] %v789
    %918 = vst [vmem:[#allocation2 + $0x1c] sm:$0xf] %v790
    %919 = vst [vmem:[#allocation2 + $0x20] sm:$0xf] %v791
    %920 = vst [vmem:[#allocation2 + $0x24] sm:$0xf] %v792
    %921 = vst [vmem:[#allocation2 + $0x28] sm:$0xf] %v793
    %922 = vst [vmem:[#allocation2 + $0x2c] sm:$0xf] %v794
    %923 = vst [vmem:[#allocation2 + $0x30] sm:$0xf] %v795
    %924 = vst [vmem:[#allocation2 + $0x34] sm:$0xf] %v796
    %925 = vst [vmem:[#allocation2 + $0x38] sm:$0xf] %v797
    %926 = vst [vmem:[#allocation2 + $0x3c] sm:$0xf] %v798
    %927 = vst [vmem:[#allocation2 + $0x40] sm:$0xf] %v799
    %928 = vst [vmem:[#allocation2 + $0x44] sm:$0xf] %v800
    %929 = vst [vmem:[#allocation2 + $0x48] sm:$0xf] %v801
    %930 = vst [vmem:[#allocation2 + $0x4c] sm:$0xf] %v802
    %931 = vst [vmem:[#allocation2 + $0x50] sm:$0xf] %v803
    %932 = vst [vmem:[#allocation2 + $0x54] sm:$0xf] %v804
    %933 = vst [vmem:[#allocation2 + $0x58] sm:$0xf] %v805
    %934 = vst [vmem:[#allocation2 + $0x5c] sm:$0xf] %v806
    %935 = vst [vmem:[#allocation2 + $0x60] sm:$0xf] %v807
    %936 = vst [vmem:[#allocation2 + $0x64] sm:$0xf] %v808
    %937 = vst [vmem:[#allocation2 + $0x68] sm:$0xf] %v809
    %938 = vst [vmem:[#allocation2 + $0x6c] sm:$0xf] %v810
    %939 = vst [vmem:[#allocation2 + $0x70] sm:$0xf] %v811
    %940 = vst [vmem:[#allocation2 + $0x74] sm:$0xf] %v812
    %941 = vst [vmem:[#allocation2 + $0x78] sm:$0xf] %v813
    %942 = vst [vmem:[#allocation2 + $0x7c] sm:$0xf] %v814
    %943 = vst [vmem:[#allocation2 + $0x80] sm:$0xf] %v815
    %944 = vst [vmem:[#allocation2 + $0x84] sm:$0xf] %v816
    %945 = vst [vmem:[#allocation2 + $0x88] sm:$0xf] %v817
    %946 = vst [vmem:[#allocation2 + $0x8c] sm:$0xf] %v818
    %947 = vst [vmem:[#allocation2 + $0x90] sm:$0xf] %v819
    %948 = vst [vmem:[#allocation2 + $0x94] sm:$0xf] %v820
    %949 = vst [vmem:[#allocation2 + $0x98] sm:$0xf] %v821
    %950 = vst [vmem:[#allocation2 + $0x9c] sm:$0xf] %v822
    %951 = vst [vmem:[#allocation2 + $0xa0] sm:$0xf] %v823
    %952 = vst [vmem:[#allocation2 + $0xa4] sm:$0xf] %v824
    %953 = vst [vmem:[#allocation2 + $0xa8] sm:$0xf] %v825
    %954 = vst [vmem:[#allocation2 + $0xac] sm:$0xf] %v826
    %955 = vst [vmem:[#allocation2 + $0xb0] sm:$0xf] %v827
    %956 = vst [vmem:[#allocation2 + $0xb4] sm:$0xf] %v828
    %957 = vst [vmem:[#allocation2 + $0xb8] sm:$0xf] %v829
    %958 = vst [vmem:[#allocation2 + $0xbc] sm:$0xf] %v830
    %959 = vst [vmem:[#allocation2 + $0xc0] sm:$0xf] %v831
    %960 = vst [vmem:[#allocation2 + $0xc4] sm:$0xf] %v832
    %961 = vst [vmem:[#allocation2 + $0xc8] sm:$0xf] %v833
    %962 = vst [vmem:[#allocation2 + $0xcc] sm:$0xf] %v834
    %963 = vst [vmem:[#allocation2 + $0xd0] sm:$0xf] %v835
    %964 = vst [vmem:[#allocation2 + $0xd4] sm:$0xf] %v836
    %965 = vst [vmem:[#allocation2 + $0xd8] sm:$0xf] %v837
    %966 = vst [vmem:[#allocation2 + $0xdc] sm:$0xf] %v838
    %967 = vst [vmem:[#allocation2 + $0xe0] sm:$0xf] %v839
    %968 = vst [vmem:[#allocation2 + $0xe4] sm:$0xf] %v840
    %969 = vst [vmem:[#allocation2 + $0xe8] sm:$0xf] %v841
    %970 = vst [vmem:[#allocation2 + $0xec] sm:$0xf] %v842
    %971 = vst [vmem:[#allocation2 + $0xf0] sm:$0xf] %v843
    %972 = vst [vmem:[#allocation2 + $0xf4] sm:$0xf] %v844
    %973 = vst [vmem:[#allocation2 + $0xf8] sm:$0xf] %v845
    %974 = vst [vmem:[#allocation2 + $0xfc] sm:$0xf] %v846
    // Predicated region
    $region10: #{tpu_custom_call.1} parent=1 // pred_check
      _
    $region11: #{tpu_custom_call.1} parent=1 // pred_check_branch
      %976 = sbr.rel (0) target = $region13
    $region12: #{tpu_custom_call.1} parent=1 // pred_region
      %s978 = ssub.s32 4096, 4096
      %979 = vsyncadd [#allocation3], %s978
      %s980 = sshll.u32 [#allocation2], 4
      %s981 = int_to_ptr.vmem [resolvable:$true] %s980
      %986 = dma.vmem_to_hbm [thread:$0]  %s981, 4096, %s2, [#allocation3], 64, 64, 4
    $region13: #{tpu_custom_call.1} parent=1 // pred_fallthru
      _
    // Predicated region
    $region14: #{tpu_custom_call.1} parent=1 // pred_check
      _
    $region15: #{tpu_custom_call.1} parent=1 // pred_check_branch
      %988 = sbr.rel (0) target = $region17
    $region16: #{tpu_custom_call.1} parent=1 // pred_region
      %989 = dma.done [#allocation3], 4096
    $region17: #{tpu_custom_call.1} parent=1 // pred_fallthru
      _
    %990 = vsyncpa [#allocation3], 1

</llo_original>
